<compile_context>
chip_gen: v7x
topology: tpu7x:2x2x1
jax: 0.10.0
libtpu: 0.0.40
codegen_flags: <defaults>
</compile_context>

<pallas_src>
import math
from functools import partial

import jax
import jax.numpy as jnp
from jax import lax
from jax.experimental import pallas as pl
from jax.experimental.pallas import tpu as pltpu

EMBED_DIM = 32          # D
LAYERS = 2              # interaction_layers
STRENGTH = 0.3          # interaction_strength
LN_EPS = 1e-5           # nn.LayerNorm default eps
NORM_EPS = 1e-12        # F.normalize default eps
NEG_INF = -1e30         # finite mask value (exp underflows to exactly 0 in f32)


def _layernorm(x, gamma, beta):
    mu = jnp.mean(x, axis=-1, keepdims=True)
    d = x - mu
    var = jnp.mean(d * d, axis=-1, keepdims=True)
    return d * lax.rsqrt(var + LN_EPS) * gamma + beta


def _interaction_kernel(x_ref, w_ref, rp_ref, out_ref, *, n_img):
    """x_ref: [T, D] stacked (img rows then prompt rows); w_ref: [2L, D, D]
    (pre-transposed, 2l = img proj, 2l+1 = prompt proj); rp_ref: [3L, T, D]
    (3l = per-row bias, 3l+1 = per-row LN gamma, 3l+2 = per-row LN beta)."""
    T, D = x_ref.shape
    scale = 1.0 / math.sqrt(D)

    cur = x_ref[...]                                            # [T, D]

    # Masks hoisted out of the (unrolled) layer loop.
    row_ids = lax.broadcasted_iota(jnp.int32, (T, 1), 0)
    is_img_row = row_ids < n_img                                # [T, 1]
    rr = lax.broadcasted_iota(jnp.int32, (T, T), 0)
    cc = lax.broadcasted_iota(jnp.int32, (T, T), 1)
    cross = (rr < n_img) != (cc < n_img)                        # [T, T]

    # LAYERS is a static Python int -> loop unrolled at trace time.
    for i in range(LAYERS):
        w_img = w_ref[2 * i]                                    # [D, D]
        w_prm = w_ref[2 * i + 1]                                # [D, D]
        bias = rp_ref[3 * i]                                    # [T, D]
        gamma = rp_ref[3 * i + 1]                               # [T, D]
        beta = rp_ref[3 * i + 2]                                # [T, D]

        # Stacked projection: two matmuls on the fused LHS, row-wise select.
        p_img = jnp.dot(cur, w_img, preferred_element_type=jnp.float32)
        p_prm = jnp.dot(cur, w_prm, preferred_element_type=jnp.float32)
        proj = jnp.where(is_img_row, p_img, p_prm) + bias       # [T, D]

        # Full cross-score in one NT matmul (contract last dims of both; no .T).
        s = lax.dot_general(proj, proj, (((1,), (1,)), ((), ())),
                            preferred_element_type=jnp.float32) * scale
        s = jnp.where(cross, s, NEG_INF)                        # keep only img<->prompt

        # Single masked softmax over the full [T, T] score matrix.
        m = jnp.max(s, axis=-1, keepdims=True)
        e = jnp.exp(s - m)                                      # masked entries -> 0
        attn = e * pl.reciprocal(jnp.sum(e, axis=-1, keepdims=True))

        # Both contexts in one matmul (zeros in attn kill same-stream terms).
        ctx = jnp.dot(attn, proj, preferred_element_type=jnp.float32)

        cur = _layernorm(cur + STRENGTH * ctx, gamma, beta)

    # Row-wise L2 normalize (F.normalize: x / max(||x||, eps)).
    norm = jnp.sqrt(jnp.sum(cur * cur, axis=-1, keepdims=True))
    out_ref[...] = cur * pl.reciprocal(jnp.maximum(norm, NORM_EPS))


def prompt_backbone_interaction(img, prompts, params):
    """img: [B, D] f32, prompts: [C, P, D] f32 (PyTorch-layout params)."""
    iw, ib, pw, pb, ing, inb, png, pnb = params
    B, D = img.shape
    C, P, _ = prompts.shape
    N = C * P
    T = B + N

    # ---- host-side packing (cheap XLA ops; kernel sees only 3 inputs) ----
    x = jnp.concatenate([img, prompts.reshape(N, D)], axis=0)           # [T, D]

    # Pre-transposed weights: [2L, D_in, D_out]; 2l = img proj, 2l+1 = prompt proj.
    w_packed = jnp.stack(
        [jnp.swapaxes(iw, 1, 2), jnp.swapaxes(pw, 1, 2)], axis=1
    ).reshape(2 * LAYERS, D, D)

    def per_row(img_vec, prm_vec):
        # [L, D] x2 -> [L, T, D]: img params for first B rows, prompt params after.
        return jnp.concatenate(
            [jnp.broadcast_to(img_vec[:, None, :], (LAYERS, B, D)),
             jnp.broadcast_to(prm_vec[:, None, :], (LAYERS, N, D))], axis=1)

    rowparams = jnp.stack(
        [per_row(ib, pb), per_row(ing, png), per_row(inb, pnb)], axis=1
    ).reshape(3 * LAYERS, T, D)

    kernel = partial(_interaction_kernel, n_img=B)

    out = pl.pallas_call(
        kernel,
        out_shape=jax.ShapeDtypeStruct((T, D), jnp.float32),
        in_specs=[pl.BlockSpec(memory_space=pltpu.MemorySpace.VMEM)] * 3,
        out_specs=pl.BlockSpec(memory_space=pltpu.MemorySpace.VMEM),
    )(x, w_packed, rowparams)

    return out[:B], out[B:].reshape(C, P, D)


def reference(img, prompts, params):
    """Pure-JAX reference mirroring the PyTorch forward exactly."""
    iw, ib, pw, pb, ing, inb, png, pnb = params
    B, D = img.shape
    C, P, _ = prompts.shape
    scale = 1.0 / math.sqrt(D)
    curr_img = img
    curr_prompt = prompts.reshape(C * P, D)
    for i in range(LAYERS):
        proj_img = curr_img @ iw[i].T + ib[i]
        proj_p = curr_prompt @ pw[i].T + pb[i]
        a_ip = jax.nn.softmax(proj_img @ proj_p.T * scale, axis=-1)
        a_pi = jax.nn.softmax(proj_p @ proj_img.T * scale, axis=-1)
        img_ctx = a_ip @ proj_p
        prm_ctx = a_pi @ proj_img
        ei = curr_img + STRENGTH * img_ctx
        mu = ei.mean(-1, keepdims=True)
        var = ((ei - mu) ** 2).mean(-1, keepdims=True)
        curr_img = (ei - mu) / jnp.sqrt(var + LN_EPS) * ing[i] + inb[i]
        ep = curr_prompt + STRENGTH * prm_ctx
        mu = ep.mean(-1, keepdims=True)
        var = ((ep - mu) ** 2).mean(-1, keepdims=True)
        curr_prompt = (ep - mu) / jnp.sqrt(var + LN_EPS) * png[i] + pnb[i]
    ni = curr_img / jnp.maximum(
        jnp.sqrt(jnp.sum(curr_img ** 2, -1, keepdims=True)), NORM_EPS)
    np_ = curr_prompt / jnp.maximum(
        jnp.sqrt(jnp.sum(curr_prompt ** 2, -1, keepdims=True)), NORM_EPS)
    return ni, np_.reshape(C, P, D)


if __name__ == "__main__":
    B, D, C, P = 8, EMBED_DIM, 2, 4

    key = jax.random.PRNGKey(0)
    ks = jax.random.split(key, 10)

    img = jax.random.normal(ks[0], (B, D), dtype=jnp.float32)
    prompts = jax.random.normal(ks[1], (C, P, D), dtype=jnp.float32)

    # deterministic synthetic parameters (per-layer stacked along axis 0,
    # PyTorch [D_out, D_in] weight layout)
    iw = jax.random.normal(ks[2], (LAYERS, D, D), dtype=jnp.float32) * 0.1
    ib = jax.random.normal(ks[3], (LAYERS, D), dtype=jnp.float32) * 0.1
    pw = jax.random.normal(ks[4], (LAYERS, D, D), dtype=jnp.float32) * 0.1
    pb = jax.random.normal(ks[5], (LAYERS, D), dtype=jnp.float32) * 0.1
    ing = 1.0 + 0.05 * jax.random.normal(ks[6], (LAYERS, D), dtype=jnp.float32)
    inb = 0.05 * jax.random.normal(ks[7], (LAYERS, D), dtype=jnp.float32)
    png = 1.0 + 0.05 * jax.random.normal(ks[8], (LAYERS, D), dtype=jnp.float32)
    pnb = 0.05 * jax.random.normal(ks[9], (LAYERS, D), dtype=jnp.float32)
    params = (iw, ib, pw, pb, ing, inb, png, pnb)

    out_img, out_prompt = prompt_backbone_interaction(img, prompts, params)
    out_img = jax.block_until_ready(out_img)
    out_prompt = jax.block_until_ready(out_prompt)

    ref_img, ref_prompt = reference(img, prompts, params)
    assert out_img.shape == (B, D) and out_prompt.shape == (C, P, D)
    assert jnp.allclose(out_img, ref_img, atol=1e-5, rtol=1e-5)
    assert jnp.allclose(out_prompt, ref_prompt, atol=1e-5, rtol=1e-5)

    print("KERNEL_OK")
</pallas_src>

<mosaic_0001>
module attributes {stable_mosaic.version = 11 : i64} {
  func.func @_interaction_kernel(%arg0: memref<16x32xf32, #tpu.memory_space<vmem>>, %arg1: memref<4x32x32xf32, #tpu.memory_space<vmem>>, %arg2: memref<6x16x32xf32, #tpu.memory_space<vmem>>, %arg3: memref<16x32xf32, #tpu.memory_space<vmem>>) attributes {dimension_semantics = [], scalar_prefetch = 0 : i64, scratch_operands = 0 : i64, tpu.core_type = #tpu.core_type<tc>} {
    %c0 = arith.constant 0 : index
    %c0_0 = arith.constant 0 : index
    %0 = vector.load %arg0[%c0, %c0_0] : memref<16x32xf32, #tpu.memory_space<vmem>>, vector<16x32xf32>
    %1 = tpu.iota {dimensions = array<i32: 0>} : vector<16x1xi32>
    %c8_i32 = arith.constant 8 : i32
    %2 = vector.broadcast %c8_i32 : i32 to vector<16x1xi32>
    %3 = arith.cmpi slt, %1, %2 : vector<16x1xi32>
    %4 = tpu.iota {dimensions = array<i32: 0>} : vector<16x16xi32>
    %5 = tpu.iota {dimensions = array<i32: 1>} : vector<16x16xi32>
    %c8_i32_1 = arith.constant 8 : i32
    %6 = vector.broadcast %c8_i32_1 : i32 to vector<16x16xi32>
    %7 = arith.cmpi slt, %4, %6 : vector<16x16xi32>
    %c8_i32_2 = arith.constant 8 : i32
    %8 = vector.broadcast %c8_i32_2 : i32 to vector<16x16xi32>
    %9 = arith.cmpi slt, %5, %8 : vector<16x16xi32>
    %10 = arith.xori %7, %9 : vector<16x16xi1>
    %c0_3 = arith.constant 0 : index
    %c0_4 = arith.constant 0 : index
    %c0_5 = arith.constant 0 : index
    %11 = vector.load %arg1[%c0_3, %c0_4, %c0_5] : memref<4x32x32xf32, #tpu.memory_space<vmem>>, vector<1x32x32xf32>
    %12 = vector.shape_cast %11 : vector<1x32x32xf32> to vector<32x32xf32>
    %c1 = arith.constant 1 : index
    %c0_6 = arith.constant 0 : index
    %c0_7 = arith.constant 0 : index
    %13 = vector.load %arg1[%c1, %c0_6, %c0_7] : memref<4x32x32xf32, #tpu.memory_space<vmem>>, vector<1x32x32xf32>
    %14 = vector.shape_cast %13 : vector<1x32x32xf32> to vector<32x32xf32>
    %c0_8 = arith.constant 0 : index
    %c0_9 = arith.constant 0 : index
    %c0_10 = arith.constant 0 : index
    %15 = vector.load %arg2[%c0_8, %c0_9, %c0_10] : memref<6x16x32xf32, #tpu.memory_space<vmem>>, vector<1x16x32xf32>
    %16 = vector.shape_cast %15 : vector<1x16x32xf32> to vector<16x32xf32>
    %c1_11 = arith.constant 1 : index
    %c0_12 = arith.constant 0 : index
    %c0_13 = arith.constant 0 : index
    %17 = vector.load %arg2[%c1_11, %c0_12, %c0_13] : memref<6x16x32xf32, #tpu.memory_space<vmem>>, vector<1x16x32xf32>
    %18 = vector.shape_cast %17 : vector<1x16x32xf32> to vector<16x32xf32>
    %c2 = arith.constant 2 : index
    %c0_14 = arith.constant 0 : index
    %c0_15 = arith.constant 0 : index
    %19 = vector.load %arg2[%c2, %c0_14, %c0_15] : memref<6x16x32xf32, #tpu.memory_space<vmem>>, vector<1x16x32xf32>
    %20 = vector.shape_cast %19 : vector<1x16x32xf32> to vector<16x32xf32>
    %cst = arith.constant dense<0.000000e+00> : vector<16x32xf32>
    %21 = tpu.matmul %0, %12, %cst {dimension_numbers = #tpu.dot_dimension_numbers<[1], [0], [0], [1], [0, 0, 1, 1], [], []>} : vector<16x32xf32>, vector<32x32xf32>, vector<16x32xf32> -> vector<16x32xf32>
    %cst_16 = arith.constant dense<0.000000e+00> : vector<16x32xf32>
    %22 = tpu.matmul %0, %14, %cst_16 {dimension_numbers = #tpu.dot_dimension_numbers<[1], [0], [0], [1], [0, 0, 1, 1], [], []>} : vector<16x32xf32>, vector<32x32xf32>, vector<16x32xf32> -> vector<16x32xf32>
    %23 = vector.shape_cast %3 : vector<16x1xi1> to vector<16x1xi1>
    %24 = vector.broadcast %23 : vector<16x1xi1> to vector<16x32xi1>
    %25 = arith.select %24, %21, %22 : vector<16x32xi1>, vector<16x32xf32>
    %26 = arith.addf %25, %16 : vector<16x32xf32>
    %cst_17 = arith.constant dense<0.000000e+00> : vector<16x16xf32>
    %27 = tpu.matmul %26, %26, %cst_17 {dimension_numbers = #tpu.dot_dimension_numbers<[1], [1], [0], [0], [0, 0, 1, 0], [], []>} : vector<16x32xf32>, vector<16x32xf32>, vector<16x16xf32> -> vector<16x16xf32>
    %cst_18 = arith.constant 0.176776692 : f32
    %28 = vector.broadcast %cst_18 : f32 to vector<16x16xf32>
    %29 = arith.mulf %27, %28 : vector<16x16xf32>
    %cst_19 = arith.constant -1.000000e+30 : f32
    %30 = vector.broadcast %cst_19 : f32 to vector<16x16xf32>
    %31 = arith.select %10, %29, %30 : vector<16x16xi1>, vector<16x16xf32>
    %cst_20 = arith.constant dense<0xFF800000> : vector<16xf32>
    %32 = vector.multi_reduction <maximumf>, %31, %cst_20 [1] : vector<16x16xf32> to vector<16xf32>
    %33 = vector.shape_cast %32 : vector<16xf32> to vector<16x1xf32>
    %34 = vector.broadcast %33 : vector<16x1xf32> to vector<16x16xf32>
    %35 = arith.subf %31, %34 : vector<16x16xf32>
    %36 = math.exp %35 : vector<16x16xf32>
    %cst_21 = arith.constant dense<0.000000e+00> : vector<16xf32>
    %37 = vector.multi_reduction <add>, %36, %cst_21 [1] : vector<16x16xf32> to vector<16xf32>
    %38 = vector.shape_cast %37 : vector<16xf32> to vector<16x1xf32>
    %39 = tpu.reciprocal %38 : vector<16x1xf32> -> vector<16x1xf32>
    %40 = vector.broadcast %39 : vector<16x1xf32> to vector<16x16xf32>
    %41 = arith.mulf %36, %40 : vector<16x16xf32>
    %cst_22 = arith.constant dense<0.000000e+00> : vector<16x32xf32>
    %42 = tpu.matmul %41, %26, %cst_22 {dimension_numbers = #tpu.dot_dimension_numbers<[1], [0], [0], [1], [0, 0, 1, 1], [], []>} : vector<16x16xf32>, vector<16x32xf32>, vector<16x32xf32> -> vector<16x32xf32>
    %cst_23 = arith.constant 3.000000e-01 : f32
    %43 = vector.broadcast %cst_23 : f32 to vector<16x32xf32>
    %44 = arith.mulf %43, %42 : vector<16x32xf32>
    %45 = arith.addf %0, %44 : vector<16x32xf32>
    %cst_24 = arith.constant dense<0.000000e+00> : vector<16xf32>
    %46 = vector.multi_reduction <add>, %45, %cst_24 [1] : vector<16x32xf32> to vector<16xf32>
    %47 = vector.shape_cast %46 : vector<16xf32> to vector<16x1xf32>
    %cst_25 = arith.constant 3.200000e+01 : f32
    %48 = vector.broadcast %cst_25 : f32 to vector<16x1xf32>
    %49 = arith.divf %47, %48 : vector<16x1xf32>
    %50 = vector.broadcast %49 : vector<16x1xf32> to vector<16x32xf32>
    %51 = arith.subf %45, %50 : vector<16x32xf32>
    %52 = arith.mulf %51, %51 : vector<16x32xf32>
    %cst_26 = arith.constant dense<0.000000e+00> : vector<16xf32>
    %53 = vector.multi_reduction <add>, %52, %cst_26 [1] : vector<16x32xf32> to vector<16xf32>
    %54 = vector.shape_cast %53 : vector<16xf32> to vector<16x1xf32>
    %cst_27 = arith.constant 3.200000e+01 : f32
    %55 = vector.broadcast %cst_27 : f32 to vector<16x1xf32>
    %56 = arith.divf %54, %55 : vector<16x1xf32>
    %cst_28 = arith.constant 9.99999974E-6 : f32
    %57 = vector.broadcast %cst_28 : f32 to vector<16x1xf32>
    %58 = arith.addf %56, %57 : vector<16x1xf32>
    %59 = math.rsqrt %58 : vector<16x1xf32>
    %60 = vector.broadcast %59 : vector<16x1xf32> to vector<16x32xf32>
    %61 = arith.mulf %51, %60 : vector<16x32xf32>
    %62 = arith.mulf %61, %18 : vector<16x32xf32>
    %63 = arith.addf %62, %20 : vector<16x32xf32>
    %c2_29 = arith.constant 2 : index
    %c0_30 = arith.constant 0 : index
    %c0_31 = arith.constant 0 : index
    %64 = vector.load %arg1[%c2_29, %c0_30, %c0_31] : memref<4x32x32xf32, #tpu.memory_space<vmem>>, vector<1x32x32xf32>
    %65 = vector.shape_cast %64 : vector<1x32x32xf32> to vector<32x32xf32>
    %c3 = arith.constant 3 : index
    %c0_32 = arith.constant 0 : index
    %c0_33 = arith.constant 0 : index
    %66 = vector.load %arg1[%c3, %c0_32, %c0_33] : memref<4x32x32xf32, #tpu.memory_space<vmem>>, vector<1x32x32xf32>
    %67 = vector.shape_cast %66 : vector<1x32x32xf32> to vector<32x32xf32>
    %c3_34 = arith.constant 3 : index
    %c0_35 = arith.constant 0 : index
    %c0_36 = arith.constant 0 : index
    %68 = vector.load %arg2[%c3_34, %c0_35, %c0_36] : memref<6x16x32xf32, #tpu.memory_space<vmem>>, vector<1x16x32xf32>
    %69 = vector.shape_cast %68 : vector<1x16x32xf32> to vector<16x32xf32>
    %c4 = arith.constant 4 : index
    %c0_37 = arith.constant 0 : index
    %c0_38 = arith.constant 0 : index
    %70 = vector.load %arg2[%c4, %c0_37, %c0_38] : memref<6x16x32xf32, #tpu.memory_space<vmem>>, vector<1x16x32xf32>
    %71 = vector.shape_cast %70 : vector<1x16x32xf32> to vector<16x32xf32>
    %c5 = arith.constant 5 : index
    %c0_39 = arith.constant 0 : index
    %c0_40 = arith.constant 0 : index
    %72 = vector.load %arg2[%c5, %c0_39, %c0_40] : memref<6x16x32xf32, #tpu.memory_space<vmem>>, vector<1x16x32xf32>
    %73 = vector.shape_cast %72 : vector<1x16x32xf32> to vector<16x32xf32>
    %cst_41 = arith.constant dense<0.000000e+00> : vector<16x32xf32>
    %74 = tpu.matmul %63, %65, %cst_41 {dimension_numbers = #tpu.dot_dimension_numbers<[1], [0], [0], [1], [0, 0, 1, 1], [], []>} : vector<16x32xf32>, vector<32x32xf32>, vector<16x32xf32> -> vector<16x32xf32>
    %cst_42 = arith.constant dense<0.000000e+00> : vector<16x32xf32>
    %75 = tpu.matmul %63, %67, %cst_42 {dimension_numbers = #tpu.dot_dimension_numbers<[1], [0], [0], [1], [0, 0, 1, 1], [], []>} : vector<16x32xf32>, vector<32x32xf32>, vector<16x32xf32> -> vector<16x32xf32>
    %76 = vector.shape_cast %3 : vector<16x1xi1> to vector<16x1xi1>
    %77 = vector.broadcast %76 : vector<16x1xi1> to vector<16x32xi1>
    %78 = arith.select %77, %74, %75 : vector<16x32xi1>, vector<16x32xf32>
    %79 = arith.addf %78, %69 : vector<16x32xf32>
    %cst_43 = arith.constant dense<0.000000e+00> : vector<16x16xf32>
    %80 = tpu.matmul %79, %79, %cst_43 {dimension_numbers = #tpu.dot_dimension_numbers<[1], [1], [0], [0], [0, 0, 1, 0], [], []>} : vector<16x32xf32>, vector<16x32xf32>, vector<16x16xf32> -> vector<16x16xf32>
    %cst_44 = arith.constant 0.176776692 : f32
    %81 = vector.broadcast %cst_44 : f32 to vector<16x16xf32>
    %82 = arith.mulf %80, %81 : vector<16x16xf32>
    %cst_45 = arith.constant -1.000000e+30 : f32
    %83 = vector.broadcast %cst_45 : f32 to vector<16x16xf32>
    %84 = arith.select %10, %82, %83 : vector<16x16xi1>, vector<16x16xf32>
    %cst_46 = arith.constant dense<0xFF800000> : vector<16xf32>
    %85 = vector.multi_reduction <maximumf>, %84, %cst_46 [1] : vector<16x16xf32> to vector<16xf32>
    %86 = vector.shape_cast %85 : vector<16xf32> to vector<16x1xf32>
    %87 = vector.broadcast %86 : vector<16x1xf32> to vector<16x16xf32>
    %88 = arith.subf %84, %87 : vector<16x16xf32>
    %89 = math.exp %88 : vector<16x16xf32>
    %cst_47 = arith.constant dense<0.000000e+00> : vector<16xf32>
    %90 = vector.multi_reduction <add>, %89, %cst_47 [1] : vector<16x16xf32> to vector<16xf32>
    %91 = vector.shape_cast %90 : vector<16xf32> to vector<16x1xf32>
    %92 = tpu.reciprocal %91 : vector<16x1xf32> -> vector<16x1xf32>
    %93 = vector.broadcast %92 : vector<16x1xf32> to vector<16x16xf32>
    %94 = arith.mulf %89, %93 : vector<16x16xf32>
    %cst_48 = arith.constant dense<0.000000e+00> : vector<16x32xf32>
    %95 = tpu.matmul %94, %79, %cst_48 {dimension_numbers = #tpu.dot_dimension_numbers<[1], [0], [0], [1], [0, 0, 1, 1], [], []>} : vector<16x16xf32>, vector<16x32xf32>, vector<16x32xf32> -> vector<16x32xf32>
    %cst_49 = arith.constant 3.000000e-01 : f32
    %96 = vector.broadcast %cst_49 : f32 to vector<16x32xf32>
    %97 = arith.mulf %96, %95 : vector<16x32xf32>
    %98 = arith.addf %63, %97 : vector<16x32xf32>
    %cst_50 = arith.constant dense<0.000000e+00> : vector<16xf32>
    %99 = vector.multi_reduction <add>, %98, %cst_50 [1] : vector<16x32xf32> to vector<16xf32>
    %100 = vector.shape_cast %99 : vector<16xf32> to vector<16x1xf32>
    %cst_51 = arith.constant 3.200000e+01 : f32
    %101 = vector.broadcast %cst_51 : f32 to vector<16x1xf32>
    %102 = arith.divf %100, %101 : vector<16x1xf32>
    %103 = vector.broadcast %102 : vector<16x1xf32> to vector<16x32xf32>
    %104 = arith.subf %98, %103 : vector<16x32xf32>
    %105 = arith.mulf %104, %104 : vector<16x32xf32>
    %cst_52 = arith.constant dense<0.000000e+00> : vector<16xf32>
    %106 = vector.multi_reduction <add>, %105, %cst_52 [1] : vector<16x32xf32> to vector<16xf32>
    %107 = vector.shape_cast %106 : vector<16xf32> to vector<16x1xf32>
    %cst_53 = arith.constant 3.200000e+01 : f32
    %108 = vector.broadcast %cst_53 : f32 to vector<16x1xf32>
    %109 = arith.divf %107, %108 : vector<16x1xf32>
    %cst_54 = arith.constant 9.99999974E-6 : f32
    %110 = vector.broadcast %cst_54 : f32 to vector<16x1xf32>
    %111 = arith.addf %109, %110 : vector<16x1xf32>
    %112 = math.rsqrt %111 : vector<16x1xf32>
    %113 = vector.broadcast %112 : vector<16x1xf32> to vector<16x32xf32>
    %114 = arith.mulf %104, %113 : vector<16x32xf32>
    %115 = arith.mulf %114, %71 : vector<16x32xf32>
    %116 = arith.addf %115, %73 : vector<16x32xf32>
    %117 = arith.mulf %116, %116 : vector<16x32xf32>
    %cst_55 = arith.constant dense<0.000000e+00> : vector<16xf32>
    %118 = vector.multi_reduction <add>, %117, %cst_55 [1] : vector<16x32xf32> to vector<16xf32>
    %119 = vector.shape_cast %118 : vector<16xf32> to vector<16x1xf32>
    %120 = math.sqrt %119 : vector<16x1xf32>
    %cst_56 = arith.constant 9.99999996E-13 : f32
    %121 = vector.broadcast %cst_56 : f32 to vector<16x1xf32>
    %122 = arith.maximumf %120, %121 : vector<16x1xf32>
    %123 = tpu.reciprocal %122 : vector<16x1xf32> -> vector<16x1xf32>
    %124 = vector.broadcast %123 : vector<16x1xf32> to vector<16x32xf32>
    %125 = arith.mulf %116, %124 : vector<16x32xf32>
    %c0_57 = arith.constant 0 : index
    %c0_58 = arith.constant 0 : index
    %126 = vector.load %arg3[%c0_57, %c0_58] : memref<16x32xf32, #tpu.memory_space<vmem>>, vector<16x32xf32>
    tpu.vector_store %arg3[%c0_57, %c0_58], %125 {strides = array<i32>} : memref<16x32xf32, #tpu.memory_space<vmem>>, vector<16x32xf32>,
    return
  }
}

</mosaic_0001>

<llo_original>
// kernel: tpu_custom_call.1
$region0: #{tpu_custom_call.1}
  #allocation0 [shape = 'u32[]', space=smem, size = 0x4, offset = 0x4, fixed_abs, tag = 'smem constant byte address 0x4 - core index']
  #allocation1 [shape = 'u32[144,128]{1,0:T(1,128)}', space=vmem, size = 0x12000, scoped, tag = 'internal scratch']
  %s0 = inlined_call_operand.hbm [shape: f32[16,32], index: 0, kind: input, shape index: {}]
  %s1 = inlined_call_operand.hbm [shape: f32[4,32,32], index: 1, kind: input, shape index: {}]
  %s2 = inlined_call_operand.hbm [shape: f32[6,16,32], index: 2, kind: input, shape index: {}]
  %s3 = inlined_call_operand.hbm [shape: f32[16,32], index: 3, kind: output, shape index: {}]
  %s4 = sld [smem:[#allocation0]]
  $region34: #{tpu_custom_call.1} parent=0
    _
  %s6 = ssub.s32 1, %s4
  %s7 = scalar_select 0, %s6, %s4
  $region1: #{tpu_custom_call.1} parent=0
    #allocation2 [shape = 'u8[8192]{0}', space=vmem, size = 0x2000, scoped, tag = 'input window, operand 0, single buffered']
    #allocation3 [shape = 's32[1]{0}', space=sflag, size = 0x4, scoped, tag = 'scoped memory for tpu_custom_call.1']
    #allocation4 [shape = 's32[1]{0}', space=sflag, size = 0x4, scoped, tag = 'scoped memory for tpu_custom_call.1']
    #allocation5 [shape = 'u8[65536]{0}', space=vmem, size = 0x10000, scoped, tag = 'input window, operand 1, single buffered']
    #allocation6 [shape = 's32[1]{0}', space=sflag, size = 0x4, scoped, tag = 'scoped memory for tpu_custom_call.1']
    #allocation7 [shape = 'u8[49152]{0}', space=vmem, size = 0xc000, scoped, tag = 'input window, operand 2, single buffered']
    #allocation8 [shape = 'u8[8192]{0}', space=vmem, size = 0x2000, scoped, tag = 'output window, operand 0, single buffered']
    %8 = vsyncpa [#allocation3], 0
    %9 = vsyncpa [#allocation6], 0
    %10 = vsyncpa [#allocation4], 0
    // Predicated region
    $region2: #{tpu_custom_call.1} parent=1 // pred_check
      _
    $region3: #{tpu_custom_call.1} parent=1 // pred_check_branch
      %12 = sbr.rel (0) target = $region5
    $region4: #{tpu_custom_call.1} parent=1 // pred_region
      %s14 = ssub.s32 256, 256
      %15 = vsyncadd [#allocation3], %s14
      %s16 = sshll.u32 [#allocation2], 4
      %s17 = int_to_ptr.vmem [resolvable:$true] %s16
      %22 = dma.hbm_to_vmem [thread:$0]  %s0, 256, %s17, [#allocation3], 128, 128, 8
    $region5: #{tpu_custom_call.1} parent=1 // pred_fallthru
      _
    // Predicated region
    $region6: #{tpu_custom_call.1} parent=1 // pred_check
      _
    $region7: #{tpu_custom_call.1} parent=1 // pred_check_branch
      %24 = sbr.rel (0) target = $region9
    $region8: #{tpu_custom_call.1} parent=1 // pred_region
      %s26 = ssub.s32 2048, 2048
      %27 = vsyncadd [#allocation6], %s26
      %s28 = sshll.u32 [#allocation5], 4
      %s29 = int_to_ptr.vmem [resolvable:$true] %s28
      %34 = dma.hbm_to_vmem [thread:$0]  %s1, 2048, %s29, [#allocation6], 128, 128, 8
    $region9: #{tpu_custom_call.1} parent=1 // pred_fallthru
      _
    // Predicated region
    $region10: #{tpu_custom_call.1} parent=1 // pred_check
      _
    $region11: #{tpu_custom_call.1} parent=1 // pred_check_branch
      %36 = sbr.rel (0) target = $region13
    $region12: #{tpu_custom_call.1} parent=1 // pred_region
      %s38 = ssub.s32 1536, 1536
      %39 = vsyncadd [#allocation6], %s38
      %s40 = sshll.u32 [#allocation7], 4
      %s41 = int_to_ptr.vmem [resolvable:$true] %s40
      %46 = dma.hbm_to_vmem [thread:$0]  %s2, 1536, %s41, [#allocation6], 128, 128, 8
    $region13: #{tpu_custom_call.1} parent=1 // pred_fallthru
      _
    // Predicated region
    $region14: #{tpu_custom_call.1} parent=1 // pred_check
      _
    $region15: #{tpu_custom_call.1} parent=1 // pred_check_branch
      %48 = sbr.rel (0) target = $region17
    $region16: #{tpu_custom_call.1} parent=1 // pred_region
      %49 = dma.done [#allocation3], 256
    $region17: #{tpu_custom_call.1} parent=1 // pred_fallthru
      _
    // Predicated region
    $region18: #{tpu_custom_call.1} parent=1 // pred_check
      _
    $region19: #{tpu_custom_call.1} parent=1 // pred_check_branch
      %51 = sbr.rel (0) target = $region21
    $region20: #{tpu_custom_call.1} parent=1 // pred_region
      %52 = dma.done [#allocation6], 2048
    $region21: #{tpu_custom_call.1} parent=1 // pred_fallthru
      _
    // Predicated region
    $region22: #{tpu_custom_call.1} parent=1 // pred_check
      _
    $region23: #{tpu_custom_call.1} parent=1 // pred_check_branch
      %54 = sbr.rel (0) target = $region25
    $region24: #{tpu_custom_call.1} parent=1 // pred_region
      %55 = dma.done [#allocation6], 1536
    $region25: #{tpu_custom_call.1} parent=1 // pred_fallthru
      _
    %v56 = vld [vmem:[#allocation2] sm:$0xff]
    %v57 = vld [vmem:[#allocation2 + $0x8] sm:$0xff]
    %v58 = vlaneseq
    %v59 = vshrl.u32 %v58, 7
    %v60 = vadd.s32 %v59, 8
    %vm61 = vcmp.lt.s32.totalorder %v59, 8
    %vm62 = vcmp.lt.s32.totalorder %v60, 8
    %v63 = vlaneseq
    %v64 = vand.u32 %v63, 127
    %vm65 = vcmp.lt.s32.totalorder %v64, 8
    %vm66 = vmxor %vm61, %vm65
    %vm67 = vmxor %vm62, %vm65
    %v68 = vld [vmem:[#allocation5] sm:$0xff]
    %v69 = vld [vmem:[#allocation5 + $0x8] sm:$0xff]
    %v70 = vld [vmem:[#allocation5 + $0x10] sm:$0xff]
    %v71 = vld [vmem:[#allocation5 + $0x18] sm:$0xff]
    %s72 = scalar_lea.vmem [#allocation5], 32
    %v73 = vld [vmem:[%s72] sm:$0xff]
    %v74 = vld [vmem:[%s72 + $0x8] sm:$0xff]
    %v75 = vld [vmem:[%s72 + $0x10] sm:$0xff]
    %v76 = vld [vmem:[%s72 + $0x18] sm:$0xff]
    %v77 = vld [vmem:[#allocation7] sm:$0xff]
    %v78 = vld [vmem:[#allocation7 + $0x8] sm:$0xff]
    %s79 = scalar_lea.vmem [#allocation7], 16
    %v80 = vld [vmem:[%s79] sm:$0xff]
    %v81 = vld [vmem:[%s79 + $0x8] sm:$0xff]
    %s82 = scalar_lea.vmem [#allocation7], 32
    %v83 = vld [vmem:[%s82] sm:$0xff]
    %v84 = vld [vmem:[%s82 + $0x8] sm:$0xff]
    %vm85 = vcmask 261120
    %v87 = vsel %vm85, %v56, 0
    %v90 = vsel %vm85, %v57, 0
    %92 = vmatprep.subr.mxu0 0.0
    %93 = vmatpush1.msra.mxu0 %v68
    %94 = vmatprep.subr.mxu0 0.0
    %95 = vmatpush1.msra.mxu0 %v69
    %96 = vmatprep.subr.mxu0 0.0
    %97 = vmatpush1.msra.mxu0 %v70
    %98 = vmatprep.subr.mxu0 0.0
    %99 = vmatpush1.msra.mxu0 %v71
    %100 = vmatprep.subr.mxu0 0.0
    %101 = vmatpush1.msra.mxu0 0.0
    %102 = vmatprep.subr.mxu0 0.0
    %103 = vmatpush1.msra.mxu0 0.0
    %104 = vmatprep.subr.mxu0 0.0
    %105 = vmatpush1.msra.mxu0 0.0
    %106 = vmatprep.subr.mxu0 0.0
    %107 = vmatpush1.msra.mxu0 0.0
    %108 = vmatprep.subr.mxu0 0.0
    %109 = vmatpush1.msra.mxu0 0.0
    %110 = vmatprep.subr.mxu0 0.0
    %111 = vmatpush1.msra.mxu0 0.0
    %112 = vmatprep.subr.mxu0 0.0
    %113 = vmatpush1.msra.mxu0 0.0
    %114 = vmatprep.subr.mxu0 0.0
    %115 = vmatpush1.msra.mxu0 0.0
    %116 = vmatprep.subr.mxu0 0.0
    %117 = vmatpush1.msra.mxu0 0.0
    %118 = vmatprep.subr.mxu0 0.0
    %119 = vmatpush1.msra.mxu0 0.0
    %120 = vmatprep.subr.mxu0 0.0
    %121 = vmatpush1.msra.mxu0 0.0
    %122 = vmatprep.subr.mxu0 0.0
    %123 = vmatpush1.msra.mxu0 0.0
    %124 = vmatprep.subr.mxu0 0.0
    %125 = vmatpush1.msra.mxu0 0.0
    %126 = vmatprep.subr.mxu0 0.0
    %127 = vmatpush1.msra.mxu0 0.0
    %128 = vmatprep.subr.mxu0 0.0
    %129 = vmatpush1.msra.mxu0 0.0
    %130 = vmatprep.subr.mxu0 0.0
    %131 = vmatpush1.msra.mxu0 0.0
    %132 = vmatprep.subr.mxu0 0.0
    %133 = vmatpush1.msra.mxu0 0.0
    %134 = vmatprep.subr.mxu0 0.0
    %135 = vmatpush1.msra.mxu0 0.0
    %136 = vmatprep.subr.mxu0 0.0
    %137 = vmatpush1.msra.mxu0 0.0
    %138 = vmatprep.subr.mxu0 0.0
    %139 = vmatpush1.msra.mxu0 0.0
    %140 = vmatprep.subr.mxu0 0.0
    %141 = vmatpush1.msra.mxu0 0.0
    %142 = vmatprep.subr.mxu0 0.0
    %143 = vmatpush1.msra.mxu0 0.0
    %144 = vmatprep.subr.mxu0 0.0
    %145 = vmatpush1.msra.mxu0 0.0
    %146 = vmatprep.subr.mxu0 0.0
    %147 = vmatpush1.msra.mxu0 0.0
    %148 = vmatprep.subr.mxu0 0.0
    %149 = vmatpush1.msra.mxu0 0.0
    %150 = vmatprep.subr.mxu0 0.0
    %151 = vmatpush1.msra.mxu0 0.0
    %152 = vmatprep.subr.mxu0 0.0
    %153 = vmatpush1.msra.mxu0 0.0
    %154 = vmatprep.subr.mxu0 0.0
    %155 = vmatpush1.msra.mxu0 0.0
    %156 = vmatprep.mubr.f32.mxu0 0.0
    %157 = vmatmul.mubr.f32.gmra.mrb[0].mxu0 %v87
    %v158 = vpop.f32.mrb[0].mxu0
    %v159 = vadd.f32 0.0, %v158
    %v160 = vpop.f32.mrb[0].mxu0
    %161 = vmatprep.mubr.f32.mxu0 0.0
    %162 = vmatmul.mubr.f32.gmra.mrb[0].mxu0 %v90
    %v163 = vpop.f32.mrb[0].mxu0
    %v164 = vadd.f32 0.0, %v163
    %v165 = vpop.f32.mrb[0].mxu0
    %166 = vdwg.mxu0
    %167 = vmatprep.subr.mxu0 0.0
    %168 = vmatpush1.msra.mxu0 %v73
    %169 = vmatprep.subr.mxu0 0.0
    %170 = vmatpush1.msra.mxu0 %v74
    %171 = vmatprep.subr.mxu0 0.0
    %172 = vmatpush1.msra.mxu0 %v75
    %173 = vmatprep.subr.mxu0 0.0
    %174 = vmatpush1.msra.mxu0 %v76
    %175 = vmatprep.subr.mxu0 0.0
    %176 = vmatpush1.msra.mxu0 0.0
    %177 = vmatprep.subr.mxu0 0.0
    %178 = vmatpush1.msra.mxu0 0.0
    %179 = vmatprep.subr.mxu0 0.0
    %180 = vmatpush1.msra.mxu0 0.0
    %181 = vmatprep.subr.mxu0 0.0
    %182 = vmatpush1.msra.mxu0 0.0
    %183 = vmatprep.subr.mxu0 0.0
    %184 = vmatpush1.msra.mxu0 0.0
    %185 = vmatprep.subr.mxu0 0.0
    %186 = vmatpush1.msra.mxu0 0.0
    %187 = vmatprep.subr.mxu0 0.0
    %188 = vmatpush1.msra.mxu0 0.0
    %189 = vmatprep.subr.mxu0 0.0
    %190 = vmatpush1.msra.mxu0 0.0
    %191 = vmatprep.subr.mxu0 0.0
    %192 = vmatpush1.msra.mxu0 0.0
    %193 = vmatprep.subr.mxu0 0.0
    %194 = vmatpush1.msra.mxu0 0.0
    %195 = vmatprep.subr.mxu0 0.0
    %196 = vmatpush1.msra.mxu0 0.0
    %197 = vmatprep.subr.mxu0 0.0
    %198 = vmatpush1.msra.mxu0 0.0
    %199 = vmatprep.subr.mxu0 0.0
    %200 = vmatpush1.msra.mxu0 0.0
    %201 = vmatprep.subr.mxu0 0.0
    %202 = vmatpush1.msra.mxu0 0.0
    %203 = vmatprep.subr.mxu0 0.0
    %204 = vmatpush1.msra.mxu0 0.0
    %205 = vmatprep.subr.mxu0 0.0
    %206 = vmatpush1.msra.mxu0 0.0
    %207 = vmatprep.subr.mxu0 0.0
    %208 = vmatpush1.msra.mxu0 0.0
    %209 = vmatprep.subr.mxu0 0.0
    %210 = vmatpush1.msra.mxu0 0.0
    %211 = vmatprep.subr.mxu0 0.0
    %212 = vmatpush1.msra.mxu0 0.0
    %213 = vmatprep.subr.mxu0 0.0
    %214 = vmatpush1.msra.mxu0 0.0
    %215 = vmatprep.subr.mxu0 0.0
    %216 = vmatpush1.msra.mxu0 0.0
    %217 = vmatprep.subr.mxu0 0.0
    %218 = vmatpush1.msra.mxu0 0.0
    %219 = vmatprep.subr.mxu0 0.0
    %220 = vmatpush1.msra.mxu0 0.0
    %221 = vmatprep.subr.mxu0 0.0
    %222 = vmatpush1.msra.mxu0 0.0
    %223 = vmatprep.subr.mxu0 0.0
    %224 = vmatpush1.msra.mxu0 0.0
    %225 = vmatprep.subr.mxu0 0.0
    %226 = vmatpush1.msra.mxu0 0.0
    %227 = vmatprep.subr.mxu0 0.0
    %228 = vmatpush1.msra.mxu0 0.0
    %229 = vmatprep.subr.mxu0 0.0
    %230 = vmatpush1.msra.mxu0 0.0
    %231 = vmatprep.mubr.f32.mxu0 0.0
    %232 = vmatmul.mubr.f32.gmra.mrb[0].mxu0 %v87
    %v233 = vpop.f32.mrb[0].mxu0
    %v234 = vadd.f32 0.0, %v233
    %v235 = vpop.f32.mrb[0].mxu0
    %236 = vmatprep.mubr.f32.mxu0 0.0
    %237 = vmatmul.mubr.f32.gmra.mrb[0].mxu0 %v90
    %v238 = vpop.f32.mrb[0].mxu0
    %v239 = vadd.f32 0.0, %v238
    %v240 = vpop.f32.mrb[0].mxu0
    %241 = vdwg.mxu0
    %v242 = vsel %vm61, 1, 0
    %v243 = vsel %vm62, 1, 0
    %vm244 = vcmp.eq.s32.totalorder %v242, 1
    %vm245 = vcmp.eq.s32.totalorder %v243, 1
    %v246 = vsel %vm244, %v159, %v234
    %v247 = vsel %vm245, %v164, %v239
    %v248 = vadd.f32 %v246, %v77
    %v249 = vadd.f32 %v247, %v78
    %v251 = vsel %vm85, %v248, 0
    %v254 = vsel %vm85, %v249, 0
    %256 = vmatprep.subr.mxu0 0.0
    %257 = vmatpush1.xpose.msra.mxu0 %v251
    %258 = vmatprep.subr.mxu0 0.0
    %259 = vmatpush1.xpose.msra.mxu0 %v254
    %260 = vmatprep.subr.mxu0 0.0
    %261 = vmatpush1.xpose.msra.mxu0 0.0
    %262 = vmatprep.subr.mxu0 0.0
    %263 = vmatpush1.xpose.msra.mxu0 0.0
    %264 = vmatprep.subr.mxu0 0.0
    %265 = vmatpush1.xpose.msra.mxu0 0.0
    %266 = vmatprep.subr.mxu0 0.0
    %267 = vmatpush1.xpose.msra.mxu0 0.0
    %268 = vmatprep.subr.mxu0 0.0
    %269 = vmatpush1.xpose.msra.mxu0 0.0
    %270 = vmatprep.subr.mxu0 0.0
    %271 = vmatpush1.xpose.msra.mxu0 0.0
    %272 = vmatprep.subr.mxu0 0.0
    %273 = vmatpush1.xpose.msra.mxu0 0.0
    %274 = vmatprep.subr.mxu0 0.0
    %275 = vmatpush1.xpose.msra.mxu0 0.0
    %276 = vmatprep.subr.mxu0 0.0
    %277 = vmatpush1.xpose.msra.mxu0 0.0
    %278 = vmatprep.subr.mxu0 0.0
    %279 = vmatpush1.xpose.msra.mxu0 0.0
    %280 = vmatprep.subr.mxu0 0.0
    %281 = vmatpush1.xpose.msra.mxu0 0.0
    %282 = vmatprep.subr.mxu0 0.0
    %283 = vmatpush1.xpose.msra.mxu0 0.0
    %284 = vmatprep.subr.mxu0 0.0
    %285 = vmatpush1.xpose.msra.mxu0 0.0
    %286 = vmatprep.subr.mxu0 0.0
    %287 = vmatpush1.xpose.msra.mxu0 0.0
    %288 = vmatprep.subr.mxu0 0.0
    %289 = vmatpush1.xpose.msra.mxu0 0.0
    %290 = vmatprep.subr.mxu0 0.0
    %291 = vmatpush1.xpose.msra.mxu0 0.0
    %292 = vmatprep.subr.mxu0 0.0
    %293 = vmatpush1.xpose.msra.mxu0 0.0
    %294 = vmatprep.subr.mxu0 0.0
    %295 = vmatpush1.xpose.msra.mxu0 0.0
    %296 = vmatprep.subr.mxu0 0.0
    %297 = vmatpush1.xpose.msra.mxu0 0.0
    %298 = vmatprep.subr.mxu0 0.0
    %299 = vmatpush1.xpose.msra.mxu0 0.0
    %300 = vmatprep.subr.mxu0 0.0
    %301 = vmatpush1.xpose.msra.mxu0 0.0
    %302 = vmatprep.subr.mxu0 0.0
    %303 = vmatpush1.xpose.msra.mxu0 0.0
    %304 = vmatprep.subr.mxu0 0.0
    %305 = vmatpush1.xpose.msra.mxu0 0.0
    %306 = vmatprep.subr.mxu0 0.0
    %307 = vmatpush1.xpose.msra.mxu0 0.0
    %308 = vmatprep.subr.mxu0 0.0
    %309 = vmatpush1.xpose.msra.mxu0 0.0
    %310 = vmatprep.subr.mxu0 0.0
    %311 = vmatpush1.xpose.msra.mxu0 0.0
    %312 = vmatprep.subr.mxu0 0.0
    %313 = vmatpush1.xpose.msra.mxu0 0.0
    %314 = vmatprep.subr.mxu0 0.0
    %315 = vmatpush1.xpose.msra.mxu0 0.0
    %316 = vmatprep.subr.mxu0 0.0
    %317 = vmatpush1.xpose.msra.mxu0 0.0
    %318 = vmatprep.subr.mxu0 0.0
    %319 = vmatpush1.xpose.msra.mxu0 0.0
    %320 = vmatprep.mubr.f32.mxu0 0.0
    %321 = vmatmul.mubr.f32.gmra.mrb[0].mxu0 %v251
    %v322 = vpop.f32.mrb[0].mxu0
    %v323 = vadd.f32 0.0, %v322
    %v324 = vpop.f32.mrb[0].mxu0
    %325 = vmatprep.mubr.f32.mxu0 0.0
    %326 = vmatmul.mubr.f32.gmra.mrb[0].mxu0 %v254
    %v327 = vpop.f32.mrb[0].mxu0
    %v328 = vadd.f32 0.0, %v327
    %v329 = vpop.f32.mrb[0].mxu0
    %330 = vdwg.mxu0
    %v331 = vmul.f32 %v323, 0.17677669
    %v332 = vmul.f32 %v328, 0.17677669
    %v333 = vsel %vm66, %v331, -1e+30
    %v334 = vsel %vm67, %v332, -1e+30
    %vm335 = vcmask 130048
    %v336 = vsel %vm335, %v333, -inf
    %337 = vmax.xlane.f32.xlu0 %v336
    %v338 = vpop.xlane.xlu0 %337
    %v339 = vsel %vm335, %v334, -inf
    %340 = vmax.xlane.f32.xlu0 %v339
    %v341 = vpop.xlane.xlu0 %340
    %v342 = vsub.f32 %v333, %v338
    %v343 = vsub.f32 %v334, %v341
    %v344 = vmul.f32 %v342, 1.442695
    %v345 = vpow.pop %v344
    %v346 = vmul.f32 %v343, 1.442695
    %v347 = vpow.pop %v346
    %v348 = vsel %vm335, %v345, 0.0
    %349 = vadd.xlane.f32.xlu0 %v348
    %v350 = vpop.xlane.xlu0 %349
    %v351 = vsel %vm335, %v347, 0.0
    %352 = vadd.xlane.f32.xlu0 %v351
    %v353 = vpop.xlane.xlu0 %352
    %v354 = vrcp.pop %v350
    %v355 = vrcp.pop %v353
    %v356 = vmul.f32 %v345, %v354
    %v357 = vmul.f32 %v347, %v355
    %v359 = vsel %vm335, %v356, 0
    %v362 = vsel %vm335, %v357, 0
    %364 = vmatprep.subr.mxu0 0.0
    %365 = vmatpush1.msra.mxu0 %v248
    %366 = vmatprep.subr.mxu0 0.0
    %367 = vmatpush1.msra.mxu0 %v249
    %368 = vmatprep.subr.mxu0 0.0
    %369 = vmatpush1.msra.mxu0 0.0
    %370 = vmatprep.subr.mxu0 0.0
    %371 = vmatpush1.msra.mxu0 0.0
    %372 = vmatprep.subr.mxu0 0.0
    %373 = vmatpush1.msra.mxu0 0.0
    %374 = vmatprep.subr.mxu0 0.0
    %375 = vmatpush1.msra.mxu0 0.0
    %376 = vmatprep.subr.mxu0 0.0
    %377 = vmatpush1.msra.mxu0 0.0
    %378 = vmatprep.subr.mxu0 0.0
    %379 = vmatpush1.msra.mxu0 0.0
    %380 = vmatprep.subr.mxu0 0.0
    %381 = vmatpush1.msra.mxu0 0.0
    %382 = vmatprep.subr.mxu0 0.0
    %383 = vmatpush1.msra.mxu0 0.0
    %384 = vmatprep.subr.mxu0 0.0
    %385 = vmatpush1.msra.mxu0 0.0
    %386 = vmatprep.subr.mxu0 0.0
    %387 = vmatpush1.msra.mxu0 0.0
    %388 = vmatprep.subr.mxu0 0.0
    %389 = vmatpush1.msra.mxu0 0.0
    %390 = vmatprep.subr.mxu0 0.0
    %391 = vmatpush1.msra.mxu0 0.0
    %392 = vmatprep.subr.mxu0 0.0
    %393 = vmatpush1.msra.mxu0 0.0
    %394 = vmatprep.subr.mxu0 0.0
    %395 = vmatpush1.msra.mxu0 0.0
    %396 = vmatprep.subr.mxu0 0.0
    %397 = vmatpush1.msra.mxu0 0.0
    %398 = vmatprep.subr.mxu0 0.0
    %399 = vmatpush1.msra.mxu0 0.0
    %400 = vmatprep.subr.mxu0 0.0
    %401 = vmatpush1.msra.mxu0 0.0
    %402 = vmatprep.subr.mxu0 0.0
    %403 = vmatpush1.msra.mxu0 0.0
    %404 = vmatprep.subr.mxu0 0.0
    %405 = vmatpush1.msra.mxu0 0.0
    %406 = vmatprep.subr.mxu0 0.0
    %407 = vmatpush1.msra.mxu0 0.0
    %408 = vmatprep.subr.mxu0 0.0
    %409 = vmatpush1.msra.mxu0 0.0
    %410 = vmatprep.subr.mxu0 0.0
    %411 = vmatpush1.msra.mxu0 0.0
    %412 = vmatprep.subr.mxu0 0.0
    %413 = vmatpush1.msra.mxu0 0.0
    %414 = vmatprep.subr.mxu0 0.0
    %415 = vmatpush1.msra.mxu0 0.0
    %416 = vmatprep.subr.mxu0 0.0
    %417 = vmatpush1.msra.mxu0 0.0
    %418 = vmatprep.subr.mxu0 0.0
    %419 = vmatpush1.msra.mxu0 0.0
    %420 = vmatprep.subr.mxu0 0.0
    %421 = vmatpush1.msra.mxu0 0.0
    %422 = vmatprep.subr.mxu0 0.0
    %423 = vmatpush1.msra.mxu0 0.0
    %424 = vmatprep.subr.mxu0 0.0
    %425 = vmatpush1.msra.mxu0 0.0
    %426 = vmatprep.subr.mxu0 0.0
    %427 = vmatpush1.msra.mxu0 0.0
    %428 = vmatprep.mubr.f32.mxu0 0.0
    %429 = vmatmul.mubr.f32.gmra.mrb[0].mxu0 %v359
    %v430 = vpop.f32.mrb[0].mxu0
    %v431 = vadd.f32 0.0, %v430
    %v432 = vpop.f32.mrb[0].mxu0
    %433 = vmatprep.mubr.f32.mxu0 0.0
    %434 = vmatmul.mubr.f32.gmra.mrb[0].mxu0 %v362
    %v435 = vpop.f32.mrb[0].mxu0
    %v436 = vadd.f32 0.0, %v435
    %v437 = vpop.f32.mrb[0].mxu0
    %438 = vdwg.mxu0
    %v439 = vmul.f32 %v431, 0.3
    %v440 = vmul.f32 %v436, 0.3
    %v441 = vadd.f32 %v56, %v439
    %v442 = vadd.f32 %v57, %v440
    %v443 = vsel %vm85, %v441, 0.0
    %444 = vadd.xlane.f32.xlu0 %v443
    %v445 = vpop.xlane.xlu0 %444
    %v446 = vsel %vm85, %v442, 0.0
    %447 = vadd.xlane.f32.xlu0 %v446
    %v448 = vpop.xlane.xlu0 %447
    %v449 = vrcp.pop 32.0
    %v450 = vmul.f32 %v445, %v449
    %v451 = vmul.f32 %v448, %v449
    %v452 = vsub.f32 %v441, %v450
    %v453 = vsub.f32 %v442, %v451
    %v454 = vmul.f32 %v452, %v452
    %v455 = vmul.f32 %v453, %v453
    %v456 = vsel %vm85, %v454, 0.0
    %457 = vadd.xlane.f32.xlu0 %v456
    %v458 = vpop.xlane.xlu0 %457
    %v459 = vsel %vm85, %v455, 0.0
    %460 = vadd.xlane.f32.xlu0 %v459
    %v461 = vpop.xlane.xlu0 %460
    %v462 = vmul.f32 %v458, %v449
    %v463 = vmul.f32 %v461, %v449
    %v464 = vadd.f32 %v462, 1e-05
    %v465 = vadd.f32 %v463, 1e-05
    %v466 = vrsqrt.pop %v464
    %v467 = vrsqrt.pop %v465
    %v468 = vmul.f32 %v452, %v466
    %v469 = vmul.f32 %v453, %v467
    %v470 = vmul.f32 %v468, %v80
    %v471 = vmul.f32 %v469, %v81
    %v472 = vadd.f32 %v470, %v83
    %v473 = vadd.f32 %v471, %v84
    %s474 = scalar_lea.vmem [#allocation5], 64
    %v475 = vld [vmem:[%s474] sm:$0xff]
    %v476 = vld [vmem:[%s474 + $0x8] sm:$0xff]
    %v477 = vld [vmem:[%s474 + $0x10] sm:$0xff]
    %v478 = vld [vmem:[%s474 + $0x18] sm:$0xff]
    %s479 = scalar_lea.vmem [#allocation5], 96
    %v480 = vld [vmem:[%s479] sm:$0xff]
    %v481 = vld [vmem:[%s479 + $0x8] sm:$0xff]
    %v482 = vld [vmem:[%s479 + $0x10] sm:$0xff]
    %v483 = vld [vmem:[%s479 + $0x18] sm:$0xff]
    %s484 = scalar_lea.vmem [#allocation7], 48
    %v485 = vld [vmem:[%s484] sm:$0xff]
    %v486 = vld [vmem:[%s484 + $0x8] sm:$0xff]
    %s487 = scalar_lea.vmem [#allocation7], 64
    %v488 = vld [vmem:[%s487] sm:$0xff]
    %v489 = vld [vmem:[%s487 + $0x8] sm:$0xff]
    %s490 = scalar_lea.vmem [#allocation7], 80
    %v491 = vld [vmem:[%s490] sm:$0xff]
    %v492 = vld [vmem:[%s490 + $0x8] sm:$0xff]
    %v494 = vsel %vm85, %v472, 0
    %v497 = vsel %vm85, %v473, 0
    %499 = vmatprep.subr.mxu0 0.0
    %500 = vmatpush1.msra.mxu0 %v475
    %501 = vmatprep.subr.mxu0 0.0
    %502 = vmatpush1.msra.mxu0 %v476
    %503 = vmatprep.subr.mxu0 0.0
    %504 = vmatpush1.msra.mxu0 %v477
    %505 = vmatprep.subr.mxu0 0.0
    %506 = vmatpush1.msra.mxu0 %v478
    %507 = vmatprep.subr.mxu0 0.0
    %508 = vmatpush1.msra.mxu0 0.0
    %509 = vmatprep.subr.mxu0 0.0
    %510 = vmatpush1.msra.mxu0 0.0
    %511 = vmatprep.subr.mxu0 0.0
    %512 = vmatpush1.msra.mxu0 0.0
    %513 = vmatprep.subr.mxu0 0.0
    %514 = vmatpush1.msra.mxu0 0.0
    %515 = vmatprep.subr.mxu0 0.0
    %516 = vmatpush1.msra.mxu0 0.0
    %517 = vmatprep.subr.mxu0 0.0
    %518 = vmatpush1.msra.mxu0 0.0
    %519 = vmatprep.subr.mxu0 0.0
    %520 = vmatpush1.msra.mxu0 0.0
    %521 = vmatprep.subr.mxu0 0.0
    %522 = vmatpush1.msra.mxu0 0.0
    %523 = vmatprep.subr.mxu0 0.0
    %524 = vmatpush1.msra.mxu0 0.0
    %525 = vmatprep.subr.mxu0 0.0
    %526 = vmatpush1.msra.mxu0 0.0
    %527 = vmatprep.subr.mxu0 0.0
    %528 = vmatpush1.msra.mxu0 0.0
    %529 = vmatprep.subr.mxu0 0.0
    %530 = vmatpush1.msra.mxu0 0.0
    %531 = vmatprep.subr.mxu0 0.0
    %532 = vmatpush1.msra.mxu0 0.0
    %533 = vmatprep.subr.mxu0 0.0
    %534 = vmatpush1.msra.mxu0 0.0
    %535 = vmatprep.subr.mxu0 0.0
    %536 = vmatpush1.msra.mxu0 0.0
    %537 = vmatprep.subr.mxu0 0.0
    %538 = vmatpush1.msra.mxu0 0.0
    %539 = vmatprep.subr.mxu0 0.0
    %540 = vmatpush1.msra.mxu0 0.0
    %541 = vmatprep.subr.mxu0 0.0
    %542 = vmatpush1.msra.mxu0 0.0
    %543 = vmatprep.subr.mxu0 0.0
    %544 = vmatpush1.msra.mxu0 0.0
    %545 = vmatprep.subr.mxu0 0.0
    %546 = vmatpush1.msra.mxu0 0.0
    %547 = vmatprep.subr.mxu0 0.0
    %548 = vmatpush1.msra.mxu0 0.0
    %549 = vmatprep.subr.mxu0 0.0
    %550 = vmatpush1.msra.mxu0 0.0
    %551 = vmatprep.subr.mxu0 0.0
    %552 = vmatpush1.msra.mxu0 0.0
    %553 = vmatprep.subr.mxu0 0.0
    %554 = vmatpush1.msra.mxu0 0.0
    %555 = vmatprep.subr.mxu0 0.0
    %556 = vmatpush1.msra.mxu0 0.0
    %557 = vmatprep.subr.mxu0 0.0
    %558 = vmatpush1.msra.mxu0 0.0
    %559 = vmatprep.subr.mxu0 0.0
    %560 = vmatpush1.msra.mxu0 0.0
    %561 = vmatprep.subr.mxu0 0.0
    %562 = vmatpush1.msra.mxu0 0.0
    %563 = vmatprep.mubr.f32.mxu0 0.0
    %564 = vmatmul.mubr.f32.gmra.mrb[0].mxu0 %v494
    %v565 = vpop.f32.mrb[0].mxu0
    %v566 = vadd.f32 0.0, %v565
    %v567 = vpop.f32.mrb[0].mxu0
    %568 = vmatprep.mubr.f32.mxu0 0.0
    %569 = vmatmul.mubr.f32.gmra.mrb[0].mxu0 %v497
    %v570 = vpop.f32.mrb[0].mxu0
    %v571 = vadd.f32 0.0, %v570
    %v572 = vpop.f32.mrb[0].mxu0
    %573 = vdwg.mxu0
    %574 = vmatprep.subr.mxu0 0.0
    %575 = vmatpush1.msra.mxu0 %v480
    %576 = vmatprep.subr.mxu0 0.0
    %577 = vmatpush1.msra.mxu0 %v481
    %578 = vmatprep.subr.mxu0 0.0
    %579 = vmatpush1.msra.mxu0 %v482
    %580 = vmatprep.subr.mxu0 0.0
    %581 = vmatpush1.msra.mxu0 %v483
    %582 = vmatprep.subr.mxu0 0.0
    %583 = vmatpush1.msra.mxu0 0.0
    %584 = vmatprep.subr.mxu0 0.0
    %585 = vmatpush1.msra.mxu0 0.0
    %586 = vmatprep.subr.mxu0 0.0
    %587 = vmatpush1.msra.mxu0 0.0
    %588 = vmatprep.subr.mxu0 0.0
    %589 = vmatpush1.msra.mxu0 0.0
    %590 = vmatprep.subr.mxu0 0.0
    %591 = vmatpush1.msra.mxu0 0.0
    %592 = vmatprep.subr.mxu0 0.0
    %593 = vmatpush1.msra.mxu0 0.0
    %594 = vmatprep.subr.mxu0 0.0
    %595 = vmatpush1.msra.mxu0 0.0
    %596 = vmatprep.subr.mxu0 0.0
    %597 = vmatpush1.msra.mxu0 0.0
    %598 = vmatprep.subr.mxu0 0.0
    %599 = vmatpush1.msra.mxu0 0.0
    %600 = vmatprep.subr.mxu0 0.0
    %601 = vmatpush1.msra.mxu0 0.0
    %602 = vmatprep.subr.mxu0 0.0
    %603 = vmatpush1.msra.mxu0 0.0
    %604 = vmatprep.subr.mxu0 0.0
    %605 = vmatpush1.msra.mxu0 0.0
    %606 = vmatprep.subr.mxu0 0.0
    %607 = vmatpush1.msra.mxu0 0.0
    %608 = vmatprep.subr.mxu0 0.0
    %609 = vmatpush1.msra.mxu0 0.0
    %610 = vmatprep.subr.mxu0 0.0
    %611 = vmatpush1.msra.mxu0 0.0
    %612 = vmatprep.subr.mxu0 0.0
    %613 = vmatpush1.msra.mxu0 0.0
    %614 = vmatprep.subr.mxu0 0.0
    %615 = vmatpush1.msra.mxu0 0.0
    %616 = vmatprep.subr.mxu0 0.0
    %617 = vmatpush1.msra.mxu0 0.0
    %618 = vmatprep.subr.mxu0 0.0
    %619 = vmatpush1.msra.mxu0 0.0
    %620 = vmatprep.subr.mxu0 0.0
    %621 = vmatpush1.msra.mxu0 0.0
    %622 = vmatprep.subr.mxu0 0.0
    %623 = vmatpush1.msra.mxu0 0.0
    %624 = vmatprep.subr.mxu0 0.0
    %625 = vmatpush1.msra.mxu0 0.0
    %626 = vmatprep.subr.mxu0 0.0
    %627 = vmatpush1.msra.mxu0 0.0
    %628 = vmatprep.subr.mxu0 0.0
    %629 = vmatpush1.msra.mxu0 0.0
    %630 = vmatprep.subr.mxu0 0.0
    %631 = vmatpush1.msra.mxu0 0.0
    %632 = vmatprep.subr.mxu0 0.0
    %633 = vmatpush1.msra.mxu0 0.0
    %634 = vmatprep.subr.mxu0 0.0
    %635 = vmatpush1.msra.mxu0 0.0
    %636 = vmatprep.subr.mxu0 0.0
    %637 = vmatpush1.msra.mxu0 0.0
    %638 = vmatprep.mubr.f32.mxu0 0.0
    %639 = vmatmul.mubr.f32.gmra.mrb[0].mxu0 %v494
    %v640 = vpop.f32.mrb[0].mxu0
    %v641 = vadd.f32 0.0, %v640
    %v642 = vpop.f32.mrb[0].mxu0
    %643 = vmatprep.mubr.f32.mxu0 0.0
    %644 = vmatmul.mubr.f32.gmra.mrb[0].mxu0 %v497
    %v645 = vpop.f32.mrb[0].mxu0
    %v646 = vadd.f32 0.0, %v645
    %v647 = vpop.f32.mrb[0].mxu0
    %648 = vdwg.mxu0
    %v649 = vsel %vm244, %v566, %v641
    %v650 = vsel %vm245, %v571, %v646
    %v651 = vadd.f32 %v649, %v485
    %v652 = vadd.f32 %v650, %v486
    %v654 = vsel %vm85, %v651, 0
    %v657 = vsel %vm85, %v652, 0
    %659 = vmatprep.subr.mxu0 0.0
    %660 = vmatpush1.xpose.msra.mxu0 %v654
    %661 = vmatprep.subr.mxu0 0.0
    %662 = vmatpush1.xpose.msra.mxu0 %v657
    %663 = vmatprep.subr.mxu0 0.0
    %664 = vmatpush1.xpose.msra.mxu0 0.0
    %665 = vmatprep.subr.mxu0 0.0
    %666 = vmatpush1.xpose.msra.mxu0 0.0
    %667 = vmatprep.subr.mxu0 0.0
    %668 = vmatpush1.xpose.msra.mxu0 0.0
    %669 = vmatprep.subr.mxu0 0.0
    %670 = vmatpush1.xpose.msra.mxu0 0.0
    %671 = vmatprep.subr.mxu0 0.0
    %672 = vmatpush1.xpose.msra.mxu0 0.0
    %673 = vmatprep.subr.mxu0 0.0
    %674 = vmatpush1.xpose.msra.mxu0 0.0
    %675 = vmatprep.subr.mxu0 0.0
    %676 = vmatpush1.xpose.msra.mxu0 0.0
    %677 = vmatprep.subr.mxu0 0.0
    %678 = vmatpush1.xpose.msra.mxu0 0.0
    %679 = vmatprep.subr.mxu0 0.0
    %680 = vmatpush1.xpose.msra.mxu0 0.0
    %681 = vmatprep.subr.mxu0 0.0
    %682 = vmatpush1.xpose.msra.mxu0 0.0
    %683 = vmatprep.subr.mxu0 0.0
    %684 = vmatpush1.xpose.msra.mxu0 0.0
    %685 = vmatprep.subr.mxu0 0.0
    %686 = vmatpush1.xpose.msra.mxu0 0.0
    %687 = vmatprep.subr.mxu0 0.0
    %688 = vmatpush1.xpose.msra.mxu0 0.0
    %689 = vmatprep.subr.mxu0 0.0
    %690 = vmatpush1.xpose.msra.mxu0 0.0
    %691 = vmatprep.subr.mxu0 0.0
    %692 = vmatpush1.xpose.msra.mxu0 0.0
    %693 = vmatprep.subr.mxu0 0.0
    %694 = vmatpush1.xpose.msra.mxu0 0.0
    %695 = vmatprep.subr.mxu0 0.0
    %696 = vmatpush1.xpose.msra.mxu0 0.0
    %697 = vmatprep.subr.mxu0 0.0
    %698 = vmatpush1.xpose.msra.mxu0 0.0
    %699 = vmatprep.subr.mxu0 0.0
    %700 = vmatpush1.xpose.msra.mxu0 0.0
    %701 = vmatprep.subr.mxu0 0.0
    %702 = vmatpush1.xpose.msra.mxu0 0.0
    %703 = vmatprep.subr.mxu0 0.0
    %704 = vmatpush1.xpose.msra.mxu0 0.0
    %705 = vmatprep.subr.mxu0 0.0
    %706 = vmatpush1.xpose.msra.mxu0 0.0
    %707 = vmatprep.subr.mxu0 0.0
    %708 = vmatpush1.xpose.msra.mxu0 0.0
    %709 = vmatprep.subr.mxu0 0.0
    %710 = vmatpush1.xpose.msra.mxu0 0.0
    %711 = vmatprep.subr.mxu0 0.0
    %712 = vmatpush1.xpose.msra.mxu0 0.0
    %713 = vmatprep.subr.mxu0 0.0
    %714 = vmatpush1.xpose.msra.mxu0 0.0
    %715 = vmatprep.subr.mxu0 0.0
    %716 = vmatpush1.xpose.msra.mxu0 0.0
    %717 = vmatprep.subr.mxu0 0.0
    %718 = vmatpush1.xpose.msra.mxu0 0.0
    %719 = vmatprep.subr.mxu0 0.0
    %720 = vmatpush1.xpose.msra.mxu0 0.0
    %721 = vmatprep.subr.mxu0 0.0
    %722 = vmatpush1.xpose.msra.mxu0 0.0
    %723 = vmatprep.mubr.f32.mxu0 0.0
    %724 = vmatmul.mubr.f32.gmra.mrb[0].mxu0 %v654
    %v725 = vpop.f32.mrb[0].mxu0
    %v726 = vadd.f32 0.0, %v725
    %v727 = vpop.f32.mrb[0].mxu0
    %728 = vmatprep.mubr.f32.mxu0 0.0
    %729 = vmatmul.mubr.f32.gmra.mrb[0].mxu0 %v657
    %v730 = vpop.f32.mrb[0].mxu0
    %v731 = vadd.f32 0.0, %v730
    %v732 = vpop.f32.mrb[0].mxu0
    %733 = vdwg.mxu0
    %v734 = vmul.f32 %v726, 0.17677669
    %v735 = vmul.f32 %v731, 0.17677669
    %v736 = vsel %vm66, %v734, -1e+30
    %v737 = vsel %vm67, %v735, -1e+30
    %v738 = vsel %vm335, %v736, -inf
    %739 = vmax.xlane.f32.xlu0 %v738
    %v740 = vpop.xlane.xlu0 %739
    %v741 = vsel %vm335, %v737, -inf
    %742 = vmax.xlane.f32.xlu0 %v741
    %v743 = vpop.xlane.xlu0 %742
    %v744 = vsub.f32 %v736, %v740
    %v745 = vsub.f32 %v737, %v743
    %v746 = vmul.f32 %v744, 1.442695
    %v747 = vpow.pop %v746
    %v748 = vmul.f32 %v745, 1.442695
    %v749 = vpow.pop %v748
    %v750 = vsel %vm335, %v747, 0.0
    %751 = vadd.xlane.f32.xlu0 %v750
    %v752 = vpop.xlane.xlu0 %751
    %v753 = vsel %vm335, %v749, 0.0
    %754 = vadd.xlane.f32.xlu0 %v753
    %v755 = vpop.xlane.xlu0 %754
    %v756 = vrcp.pop %v752
    %v757 = vrcp.pop %v755
    %v758 = vmul.f32 %v747, %v756
    %v759 = vmul.f32 %v749, %v757
    %v761 = vsel %vm335, %v758, 0
    %v764 = vsel %vm335, %v759, 0
    %766 = vmatprep.subr.mxu0 0.0
    %767 = vmatpush1.msra.mxu0 %v651
    %768 = vmatprep.subr.mxu0 0.0
    %769 = vmatpush1.msra.mxu0 %v652
    %770 = vmatprep.subr.mxu0 0.0
    %771 = vmatpush1.msra.mxu0 0.0
    %772 = vmatprep.subr.mxu0 0.0
    %773 = vmatpush1.msra.mxu0 0.0
    %774 = vmatprep.subr.mxu0 0.0
    %775 = vmatpush1.msra.mxu0 0.0
    %776 = vmatprep.subr.mxu0 0.0
    %777 = vmatpush1.msra.mxu0 0.0
    %778 = vmatprep.subr.mxu0 0.0
    %779 = vmatpush1.msra.mxu0 0.0
    %780 = vmatprep.subr.mxu0 0.0
    %781 = vmatpush1.msra.mxu0 0.0
    %782 = vmatprep.subr.mxu0 0.0
    %783 = vmatpush1.msra.mxu0 0.0
    %784 = vmatprep.subr.mxu0 0.0
    %785 = vmatpush1.msra.mxu0 0.0
    %786 = vmatprep.subr.mxu0 0.0
    %787 = vmatpush1.msra.mxu0 0.0
    %788 = vmatprep.subr.mxu0 0.0
    %789 = vmatpush1.msra.mxu0 0.0
    %790 = vmatprep.subr.mxu0 0.0
    %791 = vmatpush1.msra.mxu0 0.0
    %792 = vmatprep.subr.mxu0 0.0
    %793 = vmatpush1.msra.mxu0 0.0
    %794 = vmatprep.subr.mxu0 0.0
    %795 = vmatpush1.msra.mxu0 0.0
    %796 = vmatprep.subr.mxu0 0.0
    %797 = vmatpush1.msra.mxu0 0.0
    %798 = vmatprep.subr.mxu0 0.0
    %799 = vmatpush1.msra.mxu0 0.0
    %800 = vmatprep.subr.mxu0 0.0
    %801 = vmatpush1.msra.mxu0 0.0
    %802 = vmatprep.subr.mxu0 0.0
    %803 = vmatpush1.msra.mxu0 0.0
    %804 = vmatprep.subr.mxu0 0.0
    %805 = vmatpush1.msra.mxu0 0.0
    %806 = vmatprep.subr.mxu0 0.0
    %807 = vmatpush1.msra.mxu0 0.0
    %808 = vmatprep.subr.mxu0 0.0
    %809 = vmatpush1.msra.mxu0 0.0
    %810 = vmatprep.subr.mxu0 0.0
    %811 = vmatpush1.msra.mxu0 0.0
    %812 = vmatprep.subr.mxu0 0.0
    %813 = vmatpush1.msra.mxu0 0.0
    %814 = vmatprep.subr.mxu0 0.0
    %815 = vmatpush1.msra.mxu0 0.0
    %816 = vmatprep.subr.mxu0 0.0
    %817 = vmatpush1.msra.mxu0 0.0
    %818 = vmatprep.subr.mxu0 0.0
    %819 = vmatpush1.msra.mxu0 0.0
    %820 = vmatprep.subr.mxu0 0.0
    %821 = vmatpush1.msra.mxu0 0.0
    %822 = vmatprep.subr.mxu0 0.0
    %823 = vmatpush1.msra.mxu0 0.0
    %824 = vmatprep.subr.mxu0 0.0
    %825 = vmatpush1.msra.mxu0 0.0
    %826 = vmatprep.subr.mxu0 0.0
    %827 = vmatpush1.msra.mxu0 0.0
    %828 = vmatprep.subr.mxu0 0.0
    %829 = vmatpush1.msra.mxu0 0.0
    %830 = vmatprep.mubr.f32.mxu0 0.0
    %831 = vmatmul.mubr.f32.gmra.mrb[0].mxu0 %v761
    %v832 = vpop.f32.mrb[0].mxu0
    %v833 = vadd.f32 0.0, %v832
    %v834 = vpop.f32.mrb[0].mxu0
    %835 = vmatprep.mubr.f32.mxu0 0.0
    %836 = vmatmul.mubr.f32.gmra.mrb[0].mxu0 %v764
    %v837 = vpop.f32.mrb[0].mxu0
    %v838 = vadd.f32 0.0, %v837
    %v839 = vpop.f32.mrb[0].mxu0
    %840 = vdwg.mxu0
    %v841 = vmul.f32 %v833, 0.3
    %v842 = vmul.f32 %v838, 0.3
    %v843 = vadd.f32 %v472, %v841
    %v844 = vadd.f32 %v473, %v842
    %v845 = vsel %vm85, %v843, 0.0
    %846 = vadd.xlane.f32.xlu0 %v845
    %v847 = vpop.xlane.xlu0 %846
    %v848 = vsel %vm85, %v844, 0.0
    %849 = vadd.xlane.f32.xlu0 %v848
    %v850 = vpop.xlane.xlu0 %849
    %v851 = vmul.f32 %v847, %v449
    %v852 = vmul.f32 %v850, %v449
    %v853 = vsub.f32 %v843, %v851
    %v854 = vsub.f32 %v844, %v852
    %v855 = vmul.f32 %v853, %v853
    %v856 = vmul.f32 %v854, %v854
    %v857 = vsel %vm85, %v855, 0.0
    %858 = vadd.xlane.f32.xlu0 %v857
    %v859 = vpop.xlane.xlu0 %858
    %v860 = vsel %vm85, %v856, 0.0
    %861 = vadd.xlane.f32.xlu0 %v860
    %v862 = vpop.xlane.xlu0 %861
    %v863 = vmul.f32 %v859, %v449
    %v864 = vmul.f32 %v862, %v449
    %v865 = vadd.f32 %v863, 1e-05
    %v866 = vadd.f32 %v864, 1e-05
    %v867 = vrsqrt.pop %v865
    %v868 = vrsqrt.pop %v866
    %v869 = vmul.f32 %v853, %v867
    %v870 = vmul.f32 %v854, %v868
    %v871 = vmul.f32 %v869, %v488
    %v872 = vmul.f32 %v870, %v489
    %v873 = vadd.f32 %v871, %v491
    %v874 = vadd.f32 %v872, %v492
    %v875 = vmul.f32 %v873, %v873
    %v876 = vmul.f32 %v874, %v874
    %v877 = vsel %vm85, %v875, 0.0
    %878 = vadd.xlane.f32.xlu0 %v877
    %v879 = vpop.xlane.xlu0 %878
    %v880 = vsel %vm85, %v876, 0.0
    %881 = vadd.xlane.f32.xlu0 %v880
    %v882 = vpop.xlane.xlu0 %881
    %v883 = vrsqrt.pop %v879
    %v884 = vmul.f32 %v879, %v883
    %vm885 = vcmp.eq.f32.partialorder %v879, inf
    %v886 = vsel %vm885, %v879, %v884
    %vm887 = vcmp.eq.f32.partialorder %v879, 0.0
    %v888 = vand.u32 %v879, 2147483648
    %v889 = vsel %vm887, %v888, %v886
    %v890 = vrsqrt.pop %v882
    %v891 = vmul.f32 %v882, %v890
    %vm892 = vcmp.eq.f32.partialorder %v882, inf
    %v893 = vsel %vm892, %v882, %v891
    %vm894 = vcmp.eq.f32.partialorder %v882, 0.0
    %v895 = vand.u32 %v882, 2147483648
    %v896 = vsel %vm894, %v895, %v893
    %v897 = vmax.f32 %v889, 1e-12
    %v898 = vmax.f32 %v896, 1e-12
    %v899 = vrcp.pop %v897
    %v900 = vrcp.pop %v898
    %v901 = vmul.f32 %v873, %v899
    %v902 = vmul.f32 %v874, %v900
    %903 = vst.msk [vmem:[#allocation8] sm:$0xff] %vm85, %v901
    %904 = vst.msk [vmem:[#allocation8 + $0x8] sm:$0xff] %vm85, %v902
    // Predicated region
    $region26: #{tpu_custom_call.1} parent=1 // pred_check
      _
    $region27: #{tpu_custom_call.1} parent=1 // pred_check_branch
      %906 = sbr.rel (0) target = $region29
    $region28: #{tpu_custom_call.1} parent=1 // pred_region
      %s908 = ssub.s32 256, 256
      %909 = vsyncadd [#allocation4], %s908
      %s910 = sshll.u32 [#allocation8], 4
      %s911 = int_to_ptr.vmem [resolvable:$true] %s910
      %916 = dma.vmem_to_hbm [thread:$0]  %s911, 256, %s3, [#allocation4], 128, 128, 8
    $region29: #{tpu_custom_call.1} parent=1 // pred_fallthru
      _
    // Predicated region
    $region30: #{tpu_custom_call.1} parent=1 // pred_check
      _
    $region31: #{tpu_custom_call.1} parent=1 // pred_check_branch
      %918 = sbr.rel (0) target = $region33
    $region32: #{tpu_custom_call.1} parent=1 // pred_region
      %919 = dma.done [#allocation4], 256
    $region33: #{tpu_custom_call.1} parent=1 // pred_fallthru
      _
    %920 = vsyncpa [#allocation3], 1
    %921 = vsyncpa [#allocation6], 1
    %922 = vsyncpa [#allocation4], 1

</llo_original>
